<compile_context>
chip_gen: v7x
topology: tpu7x:2x2x1
jax: 0.10.0
libtpu: 0.0.40
codegen_flags: <defaults>
</compile_context>

<pallas_src>
import jax
import jax.numpy as jnp
import numpy as np
from jax.experimental import pallas as pl
from jax.experimental.pallas import tpu as pltpu


def _make_rope_kernel(ts, head_dim, start_pos, base):
    """Builds the kernel for one (TS, H*D) tile of q and k.

    ts, head_dim, start_pos, base are Python constants closed over the kernel.
    The rotary tables are generated in-kernel on the EUP; the interleaved
    (real, imag) pair swap is a lane rotate (XLU) + select (VPU).
    """
    neg_log_base_over_d = -float(np.log(base)) / float(head_dim)

    def kernel(q_ref, k_ref, qo_ref, ko_ref):
        hd_q = q_ref.shape[-1]
        hd_k = k_ref.shape[-1]
        hd = max(hd_q, hd_k)

        # Positions covered by this sequence tile (sublane axis).
        s0 = pl.program_id(1) * ts + start_pos
        pos = (s0 + jax.lax.broadcasted_iota(jnp.int32, (ts, 1), 0)
               ).astype(jnp.float32)                                   # (TS, 1)

        # Per-lane rotary pattern; repeats every head_dim lanes (head_dim is a
        # power of two, so only AND / subtract are needed — no vector int div).
        lane = jax.lax.broadcasted_iota(jnp.int32, (1, hd), 1)
        lane_in_head = lane & (head_dim - 1)
        parity = lane & 1                       # 0 = real slot, 1 = imag slot
        is_even = parity == 0                                          # (1, hd)
        # lane_in_head - parity == 2 * (pair index)  ->  base**(-2i/head_dim)
        inv_freq = jnp.exp((lane_in_head - parity).astype(jnp.float32)
                           * neg_log_base_over_d)                      # (1, hd)

        ang = pos * inv_freq                   # (TS, hd); EUP work hides under DMA
        cos = jnp.cos(ang)
        sin = jnp.sin(ang)
        # Fold the complex-multiply sign in: -sin at real slots, +sin at imag.
        sin_signed = jnp.where(is_even, -sin, sin)

        def rotate(x_ref, o_ref, w):
            x = x_ref[...].astype(jnp.float32)
            # Pair swap (a, b) -> (b, a) on the lane axis: even lanes take the
            # right neighbour x[..., j+1], odd lanes the left neighbour
            # x[..., j-1].  pltpu.roll == jnp.roll (shift w-1 == shift -1), and
            # the wrap-around elements are never selected.  Pairs never
            # straddle head boundaries because head_dim is even.
            up = pltpu.roll(x, shift=w - 1, axis=1)    # up[j]   = x[j+1]
            down = pltpu.roll(x, shift=1, axis=1)      # down[j] = x[j-1]
            swapped = jnp.where(is_even[:, :w], up, down)
            # (a + i b) * (cos + i sin): re = a*c - b*s, im = b*c + a*s.
            o_ref[...] = (x * cos[:, :w] + swapped * sin_signed[:, :w]
                          ).astype(o_ref.dtype)

        rotate(q_ref, qo_ref, hd_q)
        rotate(k_ref, ko_ref, hd_k)

    return kernel


def _choose_seq_tile(S, B, hd_q, hd_k, itemsize, *, budget_bytes=20 << 20,
                     min_steps=2):
    """Sequence-tile rows per grid step.

    Accounts for the double-buffered in/out blocks AND the in-kernel fp32
    temporaries (upcast, rolls, cos/sin tables, products), and keeps at least
    `min_steps` total grid steps so both v7x TensorCores get work when B == 1.
    On v6e/v5e this keeps blocks in the ~1-4 MiB range that already saturates
    HBM bandwidth; don't oversize.
    """
    sub = 8 * max(1, 4 // itemsize)            # 8 rows f32, 16 bf16, 32 int8/fp8
    per_row = (2 * 2 * (hd_q + hd_k) * itemsize      # q/k in+out, double-buffered
               + 8 * max(hd_q, hd_k) * 4)            # fp32 in-kernel temporaries
    ts = max(1, budget_bytes // per_row)
    if B < min_steps:
        ts = min(ts, max(1, S // min_steps))   # keep >= min_steps grid steps
    if ts >= S:
        return int(S)
    return int(max(sub, (ts // sub) * sub))


def rotary_position_embedding(query, key, start_pos=0, *, base=10000.0,
                              vmem_budget_bytes=20 << 20,
                              vmem_limit_bytes=32 << 20):
    """Pallas implementation of the TransformerBlock RoPE stage (rotary_emb='raw').

    query: (B, S, Hq, D), key: (B, S, Hk, D); D even power of two, interleaved
    (real, imag) pairs along D.  Hq may differ from Hk (GQA/MQA).  start_pos is
    a Python int (the KV-cache offset).  Returns (query_rot, key_rot) with the
    same shapes/dtypes.
    """
    B, S, Hq, D = query.shape
    Bk, Sk, Hk, Dk = key.shape
    assert (B, S, D) == (Bk, Sk, Dk), (query.shape, key.shape)
    assert query.dtype == key.dtype, (query.dtype, key.dtype)
    assert D % 2 == 0 and (D & (D - 1)) == 0, "head_dim must be a power of two"
    itemsize = jnp.dtype(query.dtype).itemsize
    hd_q, hd_k = Hq * D, Hk * D

    # Free row-major reshapes: lane dim = H*D (dense multiples of 128),
    # sublane dim = sequence rows.
    q2 = query.reshape(B, S, hd_q)
    k2 = key.reshape(B, S, hd_k)

    ts = _choose_seq_tile(S, B, hd_q, hd_k, itemsize,
                          budget_bytes=vmem_budget_bytes)
    n_s = pl.cdiv(S, ts)

    q_spec = pl.BlockSpec((None, ts, hd_q), lambda b, s: (b, s, 0))
    k_spec = pl.BlockSpec((None, ts, hd_k), lambda b, s: (b, s, 0))

    cost = pl.CostEstimate(
        flops=6 * B * S * (hd_q + hd_k),
        transcendentals=2 * B * S * max(hd_q, hd_k),
        bytes_accessed=2 * B * S * (hd_q + hd_k) * itemsize,
    )

    q_rot, k_rot = pl.pallas_call(
        _make_rope_kernel(ts, D, int(start_pos), base),
        grid=(B, n_s),
        in_specs=[q_spec, k_spec],
        out_specs=(q_spec, k_spec),
        out_shape=(jax.ShapeDtypeStruct((B, S, hd_q), query.dtype),
                   jax.ShapeDtypeStruct((B, S, hd_k), key.dtype)),
        compiler_params=pltpu.CompilerParams(
            dimension_semantics=("parallel", "parallel"),
            vmem_limit_bytes=vmem_limit_bytes,
        ),
        cost_estimate=cost,
    )(q2, k2)

    return q_rot.reshape(B, S, Hq, D), k_rot.reshape(B, S, Hk, D)


def _reference(query, key, start_pos=0):
    """Plain-numpy reference mirroring the PyTorch complex-multiply semantics."""
    def rot(x):
        b, s, h, d = x.shape
        freqs = 1.0 / (10000.0 ** (np.arange(0, d, 2, dtype=np.float32) / d))
        t = np.arange(start_pos, start_pos + s, dtype=np.float32)
        ang = np.outer(t, freqs)                               # (S, D/2)
        fc = (np.cos(ang) + 1j * np.sin(ang)).reshape(1, s, 1, d // 2)
        xf = np.asarray(x, dtype=np.float32).reshape(b, s, h, d // 2, 2)
        xc = xf[..., 0] + 1j * xf[..., 1]
        yc = xc * fc
        y = np.stack([yc.real, yc.imag], axis=-1).reshape(b, s, h, d)
        return y.astype(np.asarray(x).dtype)

    return rot(query), rot(key)


if __name__ == "__main__":
    # Small shapes consistent with the module: head_dim = hidden/heads = 128
    # (LLaMA default head_dim), kept small elsewhere: batch=2, seq=8, heads=4.
    B, S, H, D = 2, 8, 4, 128
    start_pos = 3

    kq, kk = jax.random.split(jax.random.PRNGKey(0))
    q = jax.random.normal(kq, (B, S, H, D), dtype=jnp.float32)
    k = jax.random.normal(kk, (B, S, H, D), dtype=jnp.float32)

    q_rot, k_rot = rotary_position_embedding(q, k, start_pos=start_pos)
    jax.block_until_ready((q_rot, k_rot))

    q_exp, k_exp = _reference(np.asarray(q), np.asarray(k), start_pos=start_pos)
    assert q_rot.shape == q.shape and q_rot.dtype == q.dtype
    assert k_rot.shape == k.shape and k_rot.dtype == k.dtype
    np.testing.assert_allclose(np.asarray(q_rot), q_exp, rtol=1e-4, atol=1e-4)
    np.testing.assert_allclose(np.asarray(k_rot), k_exp, rtol=1e-4, atol=1e-4)

    print("KERNEL_OK")
</pallas_src>

<mosaic_0001>
module attributes {stable_mosaic.version = 11 : i64} {
  func.func @kernel(%arg0: i32, %arg1: i32, %arg2: memref<1x8x512xf32, #tpu.memory_space<vmem>>, %arg3: memref<1x8x512xf32, #tpu.memory_space<vmem>>, %arg4: memref<1x8x512xf32, #tpu.memory_space<vmem>>, %arg5: memref<1x8x512xf32, #tpu.memory_space<vmem>>) attributes {dimension_semantics = [#tpu.dimension_semantics<parallel>, #tpu.dimension_semantics<parallel>], iteration_bounds = array<i64: 2, 1>, scalar_prefetch = 0 : i64, scratch_operands = 0 : i64, tpu.core_type = #tpu.core_type<tc>, window_params = [{transform_indices = @transform_0, window_bounds = array<i64: 1, 8, 512>}, {transform_indices = @transform_1, window_bounds = array<i64: 1, 8, 512>}, {transform_indices = @transform_2, window_bounds = array<i64: 1, 8, 512>}, {transform_indices = @transform_3, window_bounds = array<i64: 1, 8, 512>}]} {
    %c8_i32 = arith.constant 8 : i32
    %0 = arith.muli %arg1, %c8_i32 : i32
    %c3_i32 = arith.constant 3 : i32
    %1 = arith.addi %0, %c3_i32 : i32
    %2 = tpu.iota {dimensions = array<i32: 0>} : vector<8x1xi32>
    %3 = vector.broadcast %1 : i32 to vector<8x1xi32>
    %4 = arith.addi %3, %2 : vector<8x1xi32>
    %5 = arith.sitofp %4 : vector<8x1xi32> to vector<8x1xf32>
    %6 = tpu.iota {dimensions = array<i32: 1>} : vector<1x512xi32>
    %c127_i32 = arith.constant 127 : i32
    %7 = vector.broadcast %c127_i32 : i32 to vector<1x512xi32>
    %8 = arith.andi %6, %7 : vector<1x512xi32>
    %c1_i32 = arith.constant 1 : i32
    %9 = vector.broadcast %c1_i32 : i32 to vector<1x512xi32>
    %10 = arith.andi %6, %9 : vector<1x512xi32>
    %c0_i32 = arith.constant 0 : i32
    %11 = vector.broadcast %c0_i32 : i32 to vector<1x512xi32>
    %12 = arith.cmpi eq, %10, %11 : vector<1x512xi32>
    %13 = arith.subi %8, %10 : vector<1x512xi32>
    %14 = arith.sitofp %13 : vector<1x512xi32> to vector<1x512xf32>
    %cst = arith.constant -0.0719557852 : f32
    %15 = vector.broadcast %cst : f32 to vector<1x512xf32>
    %16 = arith.mulf %14, %15 : vector<1x512xf32>
    %17 = math.exp %16 : vector<1x512xf32>
    %18 = vector.broadcast %5 : vector<8x1xf32> to vector<8x512xf32>
    %19 = vector.broadcast %17 : vector<1x512xf32> to vector<8x512xf32>
    %20 = arith.mulf %18, %19 : vector<8x512xf32>
    %21 = math.cos %20 : vector<8x512xf32>
    %22 = math.sin %20 : vector<8x512xf32>
    %cst_0 = arith.constant 0.000000e+00 : f32
    %23 = vector.broadcast %cst_0 : f32 to vector<8x512xf32>
    %24 = arith.subf %23, %22 : vector<8x512xf32>
    %25 = vector.shape_cast %12 : vector<1x512xi1> to vector<1x512xi1>
    %26 = vector.broadcast %25 : vector<1x512xi1> to vector<8x512xi1>
    %27 = arith.select %26, %24, %22 : vector<8x512xi1>, vector<8x512xf32>
    %c0 = arith.constant 0 : index
    %c0_1 = arith.constant 0 : index
    %c0_2 = arith.constant 0 : index
    %28 = vector.load %arg2[%c0, %c0_1, %c0_2] : memref<1x8x512xf32, #tpu.memory_space<vmem>>, vector<1x8x512xf32>
    %29 = vector.shape_cast %28 : vector<1x8x512xf32> to vector<8x512xf32>
    %c511_i32 = arith.constant 511 : i32
    %30 = tpu.dynamic_rotate %29 by %c511_i32 dim 1 : vector<8x512xf32>, i32 -> vector<8x512xf32>
    %c1_i32_3 = arith.constant 1 : i32
    %31 = tpu.dynamic_rotate %29 by %c1_i32_3 dim 1 : vector<8x512xf32>, i32 -> vector<8x512xf32>
    %32 = vector.shape_cast %12 : vector<1x512xi1> to vector<1x512xi1>
    %33 = vector.broadcast %32 : vector<1x512xi1> to vector<8x512xi1>
    %34 = arith.select %33, %30, %31 : vector<8x512xi1>, vector<8x512xf32>
    %35 = arith.mulf %29, %21 : vector<8x512xf32>
    %36 = arith.mulf %34, %27 : vector<8x512xf32>
    %37 = arith.addf %35, %36 : vector<8x512xf32>
    %c0_4 = arith.constant 0 : index
    %c0_5 = arith.constant 0 : index
    %c0_6 = arith.constant 0 : index
    %38 = vector.load %arg4[%c0_4, %c0_5, %c0_6] : memref<1x8x512xf32, #tpu.memory_space<vmem>>, vector<1x8x512xf32>
    %39 = vector.shape_cast %38 : vector<1x8x512xf32> to vector<8x512xf32>
    %40 = vector.shape_cast %37 : vector<8x512xf32> to vector<1x8x512xf32>
    tpu.vector_store %arg4[%c0_4, %c0_5, %c0_6], %40 {strides = array<i32>} : memref<1x8x512xf32, #tpu.memory_space<vmem>>, vector<1x8x512xf32>,
    %c0_7 = arith.constant 0 : index
    %c0_8 = arith.constant 0 : index
    %c0_9 = arith.constant 0 : index
    %41 = vector.load %arg3[%c0_7, %c0_8, %c0_9] : memref<1x8x512xf32, #tpu.memory_space<vmem>>, vector<1x8x512xf32>
    %42 = vector.shape_cast %41 : vector<1x8x512xf32> to vector<8x512xf32>
    %c511_i32_10 = arith.constant 511 : i32
    %43 = tpu.dynamic_rotate %42 by %c511_i32_10 dim 1 : vector<8x512xf32>, i32 -> vector<8x512xf32>
    %c1_i32_11 = arith.constant 1 : i32
    %44 = tpu.dynamic_rotate %42 by %c1_i32_11 dim 1 : vector<8x512xf32>, i32 -> vector<8x512xf32>
    %45 = vector.shape_cast %12 : vector<1x512xi1> to vector<1x512xi1>
    %46 = vector.broadcast %45 : vector<1x512xi1> to vector<8x512xi1>
    %47 = arith.select %46, %43, %44 : vector<8x512xi1>, vector<8x512xf32>
    %48 = arith.mulf %42, %21 : vector<8x512xf32>
    %49 = arith.mulf %47, %27 : vector<8x512xf32>
    %50 = arith.addf %48, %49 : vector<8x512xf32>
    %c0_12 = arith.constant 0 : index
    %c0_13 = arith.constant 0 : index
    %c0_14 = arith.constant 0 : index
    %51 = vector.load %arg5[%c0_12, %c0_13, %c0_14] : memref<1x8x512xf32, #tpu.memory_space<vmem>>, vector<1x8x512xf32>
    %52 = vector.shape_cast %51 : vector<1x8x512xf32> to vector<8x512xf32>
    %53 = vector.shape_cast %50 : vector<8x512xf32> to vector<1x8x512xf32>
    tpu.vector_store %arg5[%c0_12, %c0_13, %c0_14], %53 {strides = array<i32>} : memref<1x8x512xf32, #tpu.memory_space<vmem>>, vector<1x8x512xf32>,
    return
  }
  func.func @transform_0(%arg0: i32, %arg1: i32) -> (i32, i32, i32) {
    %c0_i32 = arith.constant 0 : i32
    %c0_i32_0 = arith.constant 0 : i32
    return %arg0, %arg1, %c0_i32 : i32, i32, i32
  }
  func.func @transform_1(%arg0: i32, %arg1: i32) -> (i32, i32, i32) {
    %c0_i32 = arith.constant 0 : i32
    %c0_i32_0 = arith.constant 0 : i32
    return %arg0, %arg1, %c0_i32 : i32, i32, i32
  }
  func.func @transform_2(%arg0: i32, %arg1: i32) -> (i32, i32, i32) {
    %c0_i32 = arith.constant 0 : i32
    %c0_i32_0 = arith.constant 0 : i32
    return %arg0, %arg1, %c0_i32 : i32, i32, i32
  }
  func.func @transform_3(%arg0: i32, %arg1: i32) -> (i32, i32, i32) {
    %c0_i32 = arith.constant 0 : i32
    %c0_i32_0 = arith.constant 0 : i32
    return %arg0, %arg1, %c0_i32 : i32, i32, i32
  }
}

</mosaic_0001>

<llo_original>
// kernel: tpu_custom_call.1
$region0: #{tpu_custom_call.1}
  #allocation0 [shape = 'u32[]', space=smem, size = 0x4, offset = 0x4, fixed_abs, tag = 'smem constant byte address 0x4 - core index']
  #allocation1 [shape = 'u32[144,128]{1,0:T(1,128)}', space=vmem, size = 0x12000, scoped, tag = 'internal scratch']
  %s0 = inlined_call_operand.hbm [shape: f32[2,8,512], index: 0, kind: input, shape index: {}]
  %s1 = inlined_call_operand.hbm [shape: f32[2,8,512], index: 1, kind: input, shape index: {}]
  %s2 = inlined_call_operand.hbm [shape: f32[2,8,512], index: 2, kind: output, shape index: {0}]
  %s3 = inlined_call_operand.hbm [shape: f32[2,8,512], index: 3, kind: output, shape index: {1}]
  %4 = xla_tuple %s2, %s3
  %s5 = sld [smem:[#allocation0]]
  $region57: #{tpu_custom_call.1} parent=0
    _
  %s7 = ssub.s32 1, %s5
  %s8 = scalar_select 0, %s7, %s5
  $region1: #{tpu_custom_call.1} parent=0
    #allocation2 [shape = 'u8[32768]{0}', space=vmem, size = 0x8000, scoped, tag = 'input window, operand 0']
    #allocation3 [shape = 's32[2]{0}', space=sflag, size = 0x8, scoped, tag = 'scoped memory for tpu_custom_call.1']
    #allocation4 [shape = 's32[2]{0}', space=sflag, size = 0x8, scoped, tag = 'scoped memory for tpu_custom_call.1']
    #allocation5 [shape = 'u8[32768]{0}', space=vmem, size = 0x8000, scoped, tag = 'input window, operand 1']
    #allocation6 [shape = 's32[2]{0}', space=sflag, size = 0x8, scoped, tag = 'scoped memory for tpu_custom_call.1']
    #allocation7 [shape = 'u8[32768]{0}', space=vmem, size = 0x8000, scoped, tag = 'output window, operand 0']
    #allocation8 [shape = 'u8[32768]{0}', space=vmem, size = 0x8000, scoped, tag = 'output window, operand 1']
    #allocation9 [shape = 's32[2]{0}', space=sflag, size = 0x8, scoped, tag = 'scoped memory for tpu_custom_call.1']
    %9 = vsyncpa [#allocation3], 0
    %s10 = scalar_lea.sflag [#allocation3], 1
    %11 = vsyncpa %s10, 0
    %12 = vsyncpa [#allocation6], 0
    %s13 = scalar_lea.sflag [#allocation6], 1
    %14 = vsyncpa %s13, 0
    %15 = vsyncpa [#allocation4], 0
    %s16 = scalar_lea.sflag [#allocation4], 1
    %17 = vsyncpa %s16, 0
    %18 = vsyncpa [#allocation9], 0
    %s19 = scalar_lea.sflag [#allocation9], 1
    %20 = vsyncpa %s19, 0
    loop: start=0, step=1, limit=4
    $region2: #{tpu_custom_call.1} parent=1 // loop_pre_header
      _
    $region3: #{tpu_custom_call.1} parent=1 // loop_header
      %s22 = sphi 0, %s26
      %p23 = scmp.ge.s32.totalorder %s22, 4
      %s29 = sphi 0, %s41
      %s30 = sphi 0, %s37
      %s31 = sphi 0, %s29
      %s32 = sphi 0, %s30
      %s33 = sphi 0, %s31
      %s34 = sphi 0, %s32
      %s46 = sphi 0, %s48
      %s49 = sphi 0, %s46
      %s50 = sphi 0, %s49
      %s66 = sphi 0, %s50
      %s74 = sphi 0, %s76
      %s77 = sphi 0, %s74
      %s78 = sphi 0, %s77
      %s94 = sphi 0, %s78
      %s102 = sphi 0, %s104
      %s105 = sphi 0, %s102
      %s106 = sphi 0, %s105
      %s122 = sphi 0, %s106
      %s130 = sphi 0, %s132
      %s133 = sphi 0, %s130
      %s134 = sphi 0, %s133
      %s150 = sphi 0, %s134
    $region4: #{tpu_custom_call.1} parent=1 // loop_header_branch
      %25 = sbr.rel (%p23) target = $region8
    $region5: #{tpu_custom_call.1} parent=1 // loop_body
      %s27 = ssub.s32 %s22, 1
      %s28 = ssub.s32 %s22, 2
      %s35 = sadd.s32 1, %s30
      %p36 = scmp.ge.s32.totalorder %s35, 1
      %s37 = scalar_select %p36, 0, %s35
      %s38 = sadd.s32 1, %s29
      %s39 = scalar_select %p36, %s38, %s29
      %p40 = scmp.ge.s32.totalorder %s39, 2
      %s41 = scalar_select %p40, 0, %s39
      %s42 = ssub.s32 %s29, %s41
      %s43 = ssub.s32 %s30, %s37
      %s44 = sor.u32 %s42, %s43
      %p45 = scmp.eq.s32.totalorder %s44, 0
      %s47 = sadd.s32 %s46, 1
      %s48 = scalar_select %p45, %s46, %s47
      %p51 = pneg %p45
      %p52 = scmp.eq.s32.totalorder %s22, 1
      %p53 = por %p51, %p52
      %p54 = scmp.ne.s32.totalorder %s46, %s49
      %p55 = scmp.eq.s32.totalorder %s22, 0
      %p56 = por %p54, %p55
      %p57 = scmp.ne.s32.totalorder %s46, %s49
      %p58 = scmp.eq.s32.totalorder %s27, 1
      %p59 = por %p57, %p58
      %p60 = scmp.ne.s32.totalorder %s49, %s50
      %p61 = scmp.eq.s32.totalorder %s27, 0
      %p62 = por %p60, %p61
      %p63 = scmp.ne.s32.totalorder %s49, %s50
      %p64 = scmp.eq.s32.totalorder %s28, 1
      %p65 = por %p63, %p64
      %p67 = scmp.ne.s32.totalorder %s50, %s66
      %p68 = scmp.eq.s32.totalorder %s28, 0
      %p69 = por %p67, %p68
      %s70 = ssub.s32 %s29, %s41
      %s71 = ssub.s32 %s30, %s37
      %s72 = sor.u32 %s70, %s71
      %p73 = scmp.eq.s32.totalorder %s72, 0
      %s75 = sadd.s32 %s74, 1
      %s76 = scalar_select %p73, %s74, %s75
      %p79 = pneg %p73
      %p80 = scmp.eq.s32.totalorder %s22, 1
      %p81 = por %p79, %p80
      %p82 = scmp.ne.s32.totalorder %s74, %s77
      %p83 = scmp.eq.s32.totalorder %s22, 0
      %p84 = por %p82, %p83
      %p85 = scmp.ne.s32.totalorder %s74, %s77
      %p86 = scmp.eq.s32.totalorder %s27, 1
      %p87 = por %p85, %p86
      %p88 = scmp.ne.s32.totalorder %s77, %s78
      %p89 = scmp.eq.s32.totalorder %s27, 0
      %p90 = por %p88, %p89
      %p91 = scmp.ne.s32.totalorder %s77, %s78
      %p92 = scmp.eq.s32.totalorder %s28, 1
      %p93 = por %p91, %p92
      %p95 = scmp.ne.s32.totalorder %s78, %s94
      %p96 = scmp.eq.s32.totalorder %s28, 0
      %p97 = por %p95, %p96
      %s98 = ssub.s32 %s29, %s41
      %s99 = ssub.s32 %s30, %s37
      %s100 = sor.u32 %s98, %s99
      %p101 = scmp.eq.s32.totalorder %s100, 0
      %s103 = sadd.s32 %s102, 1
      %s104 = scalar_select %p101, %s102, %s103
      %p107 = pneg %p101
      %p108 = scmp.eq.s32.totalorder %s22, 1
      %p109 = por %p107, %p108
      %p110 = scmp.ne.s32.totalorder %s102, %s105
      %p111 = scmp.eq.s32.totalorder %s22, 0
      %p112 = por %p110, %p111
      %p113 = scmp.ne.s32.totalorder %s102, %s105
      %p114 = scmp.eq.s32.totalorder %s27, 1
      %p115 = por %p113, %p114
      %p116 = scmp.ne.s32.totalorder %s105, %s106
      %p117 = scmp.eq.s32.totalorder %s27, 0
      %p118 = por %p116, %p117
      %p119 = scmp.ne.s32.totalorder %s105, %s106
      %p120 = scmp.eq.s32.totalorder %s28, 1
      %p121 = por %p119, %p120
      %p123 = scmp.ne.s32.totalorder %s106, %s122
      %p124 = scmp.eq.s32.totalorder %s28, 0
      %p125 = por %p123, %p124
      %s126 = ssub.s32 %s29, %s41
      %s127 = ssub.s32 %s30, %s37
      %s128 = sor.u32 %s126, %s127
      %p129 = scmp.eq.s32.totalorder %s128, 0
      %s131 = sadd.s32 %s130, 1
      %s132 = scalar_select %p129, %s130, %s131
      %p135 = pneg %p129
      %p136 = scmp.eq.s32.totalorder %s22, 1
      %p137 = por %p135, %p136
      %p138 = scmp.ne.s32.totalorder %s130, %s133
      %p139 = scmp.eq.s32.totalorder %s22, 0
      %p140 = por %p138, %p139
      %p141 = scmp.ne.s32.totalorder %s130, %s133
      %p142 = scmp.eq.s32.totalorder %s27, 1
      %p143 = por %p141, %p142
      %p144 = scmp.ne.s32.totalorder %s133, %s134
      %p145 = scmp.eq.s32.totalorder %s27, 0
      %p146 = por %p144, %p145
      %p147 = scmp.ne.s32.totalorder %s133, %s134
      %p148 = scmp.eq.s32.totalorder %s28, 1
      %p149 = por %p147, %p148
      %p151 = scmp.ne.s32.totalorder %s134, %s150
      %p152 = scmp.eq.s32.totalorder %s28, 0
      %p153 = por %p151, %p152
      %p154 = scmp.le.s32.totalorder 1, %s22
      %p155 = scmp.lt.s32.totalorder %s22, 3
      %p156 = pnand %p154, %p155
      %p157 = pneg %p156
      // Predicated region
      $region9: #{tpu_custom_call.1} parent=5 // pred_check
        _
      $region10: #{tpu_custom_call.1} parent=5 // pred_check_branch
        %159 = sbr.rel (%p156) target = $region12
      $region11: #{tpu_custom_call.1} parent=5 // pred_region
        %s160 = ssub.s32 %s22, 1
      $region12: #{tpu_custom_call.1} parent=5 // pred_fallthru
        _
      %p161 = scmp.lt.s32.totalorder %s22, 2
      // Predicated region
      $region13: #{tpu_custom_call.1} parent=5 // pred_check
        %p162 = pneg %p161
      $region14: #{tpu_custom_call.1} parent=5 // pred_check_branch
        %164 = sbr.rel (%p162) target = $region16
      $region15: #{tpu_custom_call.1} parent=5 // pred_region
        // Predicated region
        $region17: #{tpu_custom_call.1} parent=15 // pred_check
          %p165 = pneg %p56
        $region18: #{tpu_custom_call.1} parent=15 // pred_check_branch
          %167 = sbr.rel (%p165) target = $region20
        $region19: #{tpu_custom_call.1} parent=15 // pred_region
          %s168 = sand.u32 %s46, 1
          %s169 = scalar_lea.sflag [#allocation3], %s168
          %s170 = sand.u32 %s46, 1
          %s171 = smul.addr %s170, 32
          %s172 = scalar_lea.vmem [#allocation2], %s171
          %s174 = ssub.s32 512, 512
          %175 = vsyncadd %s169, %s174
          %s176 = smul.addr %s30, 4
          %s177 = smul.addr %s29, 4
          %s178 = sadd.s32 %s176, %s177
          %s179 = smul.addr %s178, 128
          %s180 = scalar_lea.hbm %s0, %s179
          %s182 = sshll.u32 %s172, 4
          %s183 = int_to_ptr.vmem [resolvable:$true] %s182
          %185 = dma.hbm_to_vmem [thread:$0]  %s180, 512, %s183, %s169
        $region20: #{tpu_custom_call.1} parent=15 // pred_fallthru
          _
        // Predicated region
        $region21: #{tpu_custom_call.1} parent=15 // pred_check
          %p186 = pneg %p84
        $region22: #{tpu_custom_call.1} parent=15 // pred_check_branch
          %188 = sbr.rel (%p186) target = $region24
        $region23: #{tpu_custom_call.1} parent=15 // pred_region
          %s189 = sand.u32 %s74, 1
          %s190 = scalar_lea.sflag [#allocation6], %s189
          %s191 = sand.u32 %s74, 1
          %s192 = smul.addr %s191, 32
          %s193 = scalar_lea.vmem [#allocation5], %s192
          %s195 = ssub.s32 512, 512
          %196 = vsyncadd %s190, %s195
          %s197 = smul.addr %s30, 4
          %s198 = smul.addr %s29, 4
          %s199 = sadd.s32 %s197, %s198
          %s200 = smul.addr %s199, 128
          %s201 = scalar_lea.hbm %s1, %s200
          %s203 = sshll.u32 %s193, 4
          %s204 = int_to_ptr.vmem [resolvable:$true] %s203
          %206 = dma.hbm_to_vmem [thread:$0]  %s201, 512, %s204, %s190
        $region24: #{tpu_custom_call.1} parent=15 // pred_fallthru
          _
      $region16: #{tpu_custom_call.1} parent=5 // pred_fallthru
        _
      %p207 = scmp.le.s32.totalorder 1, %s22
      %p208 = scmp.lt.s32.totalorder %s22, 3
      %p209 = pnand %p207, %p208
      %p210 = pneg %p209
      // Predicated region
      $region25: #{tpu_custom_call.1} parent=5 // pred_check
        _
      $region26: #{tpu_custom_call.1} parent=5 // pred_check_branch
        %212 = sbr.rel (%p209) target = $region28
      $region27: #{tpu_custom_call.1} parent=5 // pred_region
        %s213 = ssub.s32 %s22, 1
        %s214 = sand.u32 %s49, 1
        %s215 = scalar_lea.sflag [#allocation3], %s214
        %s216 = sand.u32 %s49, 1
        %s217 = smul.addr %s216, 32
        %s218 = scalar_lea.vmem [#allocation2], %s217
        // Predicated region
        $region29: #{tpu_custom_call.1} parent=27 // pred_check
          %p219 = pneg %p62
        $region30: #{tpu_custom_call.1} parent=27 // pred_check_branch
          %221 = sbr.rel (%p219) target = $region32
        $region31: #{tpu_custom_call.1} parent=27 // pred_region
          %222 = dma.done %s215, 512
        $region32: #{tpu_custom_call.1} parent=27 // pred_fallthru
          _
        %s223 = sand.u32 %s77, 1
        %s224 = scalar_lea.sflag [#allocation6], %s223
        %s225 = sand.u32 %s77, 1
        %s226 = smul.addr %s225, 32
        %s227 = scalar_lea.vmem [#allocation5], %s226
        // Predicated region
        $region33: #{tpu_custom_call.1} parent=27 // pred_check
          %p228 = pneg %p90
        $region34: #{tpu_custom_call.1} parent=27 // pred_check_branch
          %230 = sbr.rel (%p228) target = $region36
        $region35: #{tpu_custom_call.1} parent=27 // pred_region
          %231 = dma.done %s224, 512
        $region36: #{tpu_custom_call.1} parent=27 // pred_fallthru
          _
        %s232 = sand.u32 %s49, 1
        %s233 = scalar_lea.sflag [#allocation3], %s232
        %s234 = sand.u32 %s49, 1
        %s235 = smul.addr %s234, 32
        %s236 = scalar_lea.vmem [#allocation2], %s235
        %p237 = pneg %p62
        %p238 = pneg %p59
        %s239 = sand.u32 %s77, 1
        %s240 = scalar_lea.sflag [#allocation6], %s239
        %s241 = sand.u32 %s77, 1
        %s242 = smul.addr %s241, 32
        %s243 = scalar_lea.vmem [#allocation5], %s242
        %p244 = pneg %p90
        %p245 = pneg %p87
        %p246 = pneg %p118
        %p247 = pneg %p115
        %s248 = sand.u32 %s105, 1
        %s249 = scalar_lea.sflag [#allocation4], %s248
        %s250 = sand.u32 %s105, 1
        %s251 = smul.addr %s250, 32
        %s252 = scalar_lea.vmem [#allocation7], %s251
        %p253 = pneg %p146
        %p254 = pneg %p143
        %s255 = sand.u32 %s133, 1
        %s256 = scalar_lea.sflag [#allocation9], %s255
        %s257 = sand.u32 %s133, 1
        %s258 = smul.addr %s257, 32
        %s259 = scalar_lea.vmem [#allocation8], %s258
        %s260 = smul.u32 %s32, 8
        %s261 = sadd.s32 %s260, 3
        %v262 = vlaneseq
        %v263 = vshrl.u32 %v262, 7
        %v264 = vstv %s261
        %v265 = vadd.s32 %v264, %v263
        %v266 = vcvt.s32.f32 %v265
        %v267 = vlaneseq
        %v268 = vand.u32 %v267, 127
        %v269 = vadd.s32 %v268, 128
        %v270 = vadd.s32 %v268, 256
        %v271 = vadd.s32 %v268, 384
        %v272 = vand.u32 %v268, 127
        %v273 = vand.u32 %v269, 127
        %v274 = vand.u32 %v270, 127
        %v275 = vand.u32 %v271, 127
        %v276 = vand.u32 %v268, 1
        %v277 = vand.u32 %v269, 1
        %v278 = vand.u32 %v270, 1
        %v279 = vand.u32 %v271, 1
        %vm280 = vcmp.eq.s32.totalorder %v276, 0
        %vm281 = vcmp.eq.s32.totalorder %v277, 0
        %vm282 = vcmp.eq.s32.totalorder %v278, 0
        %vm283 = vcmp.eq.s32.totalorder %v279, 0
        %v284 = vsub.s32 %v272, %v276
        %v285 = vsub.s32 %v273, %v277
        %v286 = vsub.s32 %v274, %v278
        %v287 = vsub.s32 %v275, %v279
        %v288 = vcvt.s32.f32 %v284
        %v289 = vcvt.s32.f32 %v285
        %v290 = vcvt.s32.f32 %v286
        %v291 = vcvt.s32.f32 %v287
        %v292 = vmul.f32 %v288, -0.071955785
        %v293 = vmul.f32 %v289, -0.071955785
        %v294 = vmul.f32 %v290, -0.071955785
        %v295 = vmul.f32 %v291, -0.071955785
        %v296 = vmul.f32 %v292, 1.442695
        %v297 = vpow.pop %v296
        %v298 = vmul.f32 %v293, 1.442695
        %v299 = vpow.pop %v298
        %v300 = vmul.f32 %v294, 1.442695
        %v301 = vpow.pop %v300
        %v302 = vmul.f32 %v295, 1.442695
        %v303 = vpow.pop %v302
        %v304 = vmul.f32 %v266, %v297
        %v305 = vmul.f32 %v266, %v299
        %v306 = vmul.f32 %v266, %v301
        %v307 = vmul.f32 %v266, %v303
        %v308 = vand.u32 2147483647, %v304
        %vm309 = vcmp.le.f32.partialorder %v308, 0.7853982
        %vm310 = vcmp.lt.s32.totalorder %v304, 0
        %v311 = vand.u32 %v304, 2139095040
        %v312 = vshrl.u32 %v311, 23
        %v313 = vsub.s32 %v312, 127
        %v314 = vand.u32 2147483647, %v304
        %v315 = vand.u32 %v314, 8388607
        %v316 = vor.u32 %v315, 8388608
        %v317 = vsub.s32 0, %v316
        %v318 = vadd.s32 %v313, 1
        %vm319 = vcmp.gt.s32.totalorder %v318, 0
        %v320 = vsel %vm319, %v318, 0
        %v321 = vshrl.u32 %v320, 5
        %v322 = vand.u32 %v320, 31
        %v323 = vsub.s32 32, %v322
        %v324 = vshrl.u32 683565275, %v323
        %v325 = vshll.u32 683565275, %v322
        %v326 = vshrl.u32 2475754826, %v323
        %v327 = vor.u32 %v325, %v326
        %v328 = vshll.u32 2475754826, %v322
        %v329 = vshrl.u32 2131351028, %v323
        %v330 = vor.u32 %v328, %v329
        %v331 = vshll.u32 2131351028, %v322
        %v332 = vshrl.u32 2102212464, %v323
        %v333 = vor.u32 %v331, %v332
        %v334 = vshll.u32 2102212464, %v322
        %v335 = vshrl.u32 920167782, %v323
        %v336 = vor.u32 %v334, %v335
        %v337 = vshll.u32 920167782, %v322
        %v338 = vshrl.u32 1326507024, %v323
        %v339 = vor.u32 %v337, %v338
        %vm340 = vcmp.lt.s32.totalorder %v321, 1
        %vm341 = vcmp.lt.s32.totalorder %v321, 2
        %vm342 = vcmp.lt.s32.totalorder %v321, 3
        %vm343 = vcmp.lt.s32.totalorder %v321, 4
        %v344 = vsel %vm340, %v324, %v327
        %v345 = vsel %vm343, %v333, 2102212464
        %v346 = vsel %vm342, %v330, %v345
        %v347 = vsel %vm341, %v344, %v346
        %v348 = vsel %vm340, %v327, %v330
        %v349 = vsel %vm343, %v336, 920167782
        %v350 = vsel %vm342, %v333, %v349
        %v351 = vsel %vm341, %v348, %v350
        %v352 = vsel %vm340, %v330, %v333
        %v353 = vsel %vm343, %v339, 1326507024
        %v354 = vsel %vm342, %v336, %v353
        %v355 = vsel %vm341, %v352, %v354
        %v356 = vshll.u32 %v316, 8
        %v357 = vmul.u32.u64.compose %v356, %v355
        %v358 = vextract.low.u32 %v357
        %v359 = vextract.high.u32 %v357
        %v360 = vmul.u32.u64.compose %v356, %v351
        %v361 = vextract.low.u32 %v360
        %v362 = vextract.high.u32 %v360
        %v363 = vmul.u32 %v356, %v347
        %v364 = vadd.s32 %v359, %v361
        %vm365 = vc.u32 %v359, %v361
        %v366 = vadd.s32 %v362, 1
        %v367 = vsel %vm365, %v366, %v362
        %v368 = vadd.s32 %v363, %v367
        %v369 = vadd.s32 %v368, 536870912
        %v370 = vshrl.u32 %v369, 30
        %v371 = vshll.u32 %v370, 30
        %v372 = vsub.s32 %v368, %v371
        %vm373 = vcmp.lt.s32.totalorder %v372, 0
        %v374 = vsub.s32 0, %v372
        %v375 = vsel %vm373, %v374, %v372
        %v376 = vclz %v375
        %v377 = vsub.s32 %v376, 2
        %vm378 = vcmp.gt.s32.totalorder 0, %v377
        %v379 = vsel %vm378, 0, %v377
        %v380 = vsub.s32 32, %v379
        %v381 = vshll.u32 %v372, %v379
        %v382 = vshrl.u32 %v364, %v380
        %v383 = vor.u32 %v381, %v382
        %v384 = vsub.s32 4294967266, %v379
        %v385 = vadd.s32 %v384, 127
        %v386 = vshll.u32 %v385, 23
        %v387 = vor.u32 4788187, %v386
        %v388 = vand.u32 2147483647, %v387
        %v390 = vcvt.s32.f32 %v383
        %v391 = vmul.f32 %v390, %v388
        %v392 = vxor.u32 %v391, 2147483648
        %v393 = vsel %vm310, %v392, %v391
        %v394 = vsub.s32 4, %v370
        %v395 = vsel %vm310, %v394, %v370
        %v396 = vsel %vm309, %v304, %v393
        %v397 = vsel %vm309, 0, %v395
        %v398 = vcosq.f32.pop %v396
        %v399 = vsinq.f32.pop %v396
        %vm400 = vweird.f32 %v304
        %v401 = vand.u32 %v397, 3
        %vm402 = vcmp.lt.s32.totalorder %v401, 2
        %vm403 = vcmp.eq.s32.totalorder %v401, 0
        %v404 = vxor.u32 %v399, 2147483648
        %v405 = vsel %vm403, %v398, %v404
        %vm406 = vcmp.eq.s32.totalorder %v401, 2
        %v407 = vxor.u32 %v398, 2147483648
        %v408 = vsel %vm406, %v407, %v399
        %v409 = vsel %vm402, %v405, %v408
        %v410 = vsel %vm400, nan, %v409
        %v411 = vand.u32 2147483647, %v305
        %vm412 = vcmp.le.f32.partialorder %v411, 0.7853982
        %vm413 = vcmp.lt.s32.totalorder %v305, 0
        %v414 = vand.u32 %v305, 2139095040
        %v415 = vshrl.u32 %v414, 23
        %v416 = vsub.s32 %v415, 127
        %v417 = vand.u32 2147483647, %v305
        %v418 = vand.u32 %v417, 8388607
        %v419 = vor.u32 %v418, 8388608
        %v420 = vsub.s32 0, %v419
        %v421 = vadd.s32 %v416, 1
        %vm422 = vcmp.gt.s32.totalorder %v421, 0
        %v423 = vsel %vm422, %v421, 0
        %v424 = vshrl.u32 %v423, 5
        %v425 = vand.u32 %v423, 31
        %v426 = vsub.s32 32, %v425
        %v427 = vshrl.u32 683565275, %v426
        %v428 = vshll.u32 683565275, %v425
        %v429 = vshrl.u32 2475754826, %v426
        %v430 = vor.u32 %v428, %v429
        %v431 = vshll.u32 2475754826, %v425
        %v432 = vshrl.u32 2131351028, %v426
        %v433 = vor.u32 %v431, %v432
        %v434 = vshll.u32 2131351028, %v425
        %v435 = vshrl.u32 2102212464, %v426
        %v436 = vor.u32 %v434, %v435
        %v437 = vshll.u32 2102212464, %v425
        %v438 = vshrl.u32 920167782, %v426
        %v439 = vor.u32 %v437, %v438
        %v440 = vshll.u32 920167782, %v425
        %v441 = vshrl.u32 1326507024, %v426
        %v442 = vor.u32 %v440, %v441
        %vm443 = vcmp.lt.s32.totalorder %v424, 1
        %vm444 = vcmp.lt.s32.totalorder %v424, 2
        %vm445 = vcmp.lt.s32.totalorder %v424, 3
        %vm446 = vcmp.lt.s32.totalorder %v424, 4
        %v447 = vsel %vm443, %v427, %v430
        %v448 = vsel %vm446, %v436, 2102212464
        %v449 = vsel %vm445, %v433, %v448
        %v450 = vsel %vm444, %v447, %v449
        %v451 = vsel %vm443, %v430, %v433
        %v452 = vsel %vm446, %v439, 920167782
        %v453 = vsel %vm445, %v436, %v452
        %v454 = vsel %vm444, %v451, %v453
        %v455 = vsel %vm443, %v433, %v436
        %v456 = vsel %vm446, %v442, 1326507024
        %v457 = vsel %vm445, %v439, %v456
        %v458 = vsel %vm444, %v455, %v457
        %v459 = vshll.u32 %v419, 8
        %v460 = vmul.u32.u64.compose %v459, %v458
        %v461 = vextract.low.u32 %v460
        %v462 = vextract.high.u32 %v460
        %v463 = vmul.u32.u64.compose %v459, %v454
        %v464 = vextract.low.u32 %v463
        %v465 = vextract.high.u32 %v463
        %v466 = vmul.u32 %v459, %v450
        %v467 = vadd.s32 %v462, %v464
        %vm468 = vc.u32 %v462, %v464
        %v469 = vadd.s32 %v465, 1
        %v470 = vsel %vm468, %v469, %v465
        %v471 = vadd.s32 %v466, %v470
        %v472 = vadd.s32 %v471, 536870912
        %v473 = vshrl.u32 %v472, 30
        %v474 = vshll.u32 %v473, 30
        %v475 = vsub.s32 %v471, %v474
        %vm476 = vcmp.lt.s32.totalorder %v475, 0
        %v477 = vsub.s32 0, %v475
        %v478 = vsel %vm476, %v477, %v475
        %v479 = vclz %v478
        %v480 = vsub.s32 %v479, 2
        %vm481 = vcmp.gt.s32.totalorder 0, %v480
        %v482 = vsel %vm481, 0, %v480
        %v483 = vsub.s32 32, %v482
        %v484 = vshll.u32 %v475, %v482
        %v485 = vshrl.u32 %v467, %v483
        %v486 = vor.u32 %v484, %v485
        %v487 = vsub.s32 4294967266, %v482
        %v488 = vadd.s32 %v487, 127
        %v489 = vshll.u32 %v488, 23
        %v490 = vor.u32 4788187, %v489
        %v491 = vand.u32 2147483647, %v490
        %v493 = vcvt.s32.f32 %v486
        %v494 = vmul.f32 %v493, %v491
        %v495 = vxor.u32 %v494, 2147483648
        %v496 = vsel %vm413, %v495, %v494
        %v497 = vsub.s32 4, %v473
        %v498 = vsel %vm413, %v497, %v473
        %v499 = vsel %vm412, %v305, %v496
        %v500 = vsel %vm412, 0, %v498
        %v501 = vcosq.f32.pop %v499
        %v502 = vsinq.f32.pop %v499
        %vm503 = vweird.f32 %v305
        %v504 = vand.u32 %v500, 3
        %vm505 = vcmp.lt.s32.totalorder %v504, 2
        %vm506 = vcmp.eq.s32.totalorder %v504, 0
        %v507 = vxor.u32 %v502, 2147483648
        %v508 = vsel %vm506, %v501, %v507
        %vm509 = vcmp.eq.s32.totalorder %v504, 2
        %v510 = vxor.u32 %v501, 2147483648
        %v511 = vsel %vm509, %v510, %v502
        %v512 = vsel %vm505, %v508, %v511
        %v513 = vsel %vm503, nan, %v512
        %v514 = vand.u32 2147483647, %v306
        %vm515 = vcmp.le.f32.partialorder %v514, 0.7853982
        %vm516 = vcmp.lt.s32.totalorder %v306, 0
        %v517 = vand.u32 %v306, 2139095040
        %v518 = vshrl.u32 %v517, 23
        %v519 = vsub.s32 %v518, 127
        %v520 = vand.u32 2147483647, %v306
        %v521 = vand.u32 %v520, 8388607
        %v522 = vor.u32 %v521, 8388608
        %v523 = vsub.s32 0, %v522
        %v524 = vadd.s32 %v519, 1
        %vm525 = vcmp.gt.s32.totalorder %v524, 0
        %v526 = vsel %vm525, %v524, 0
        %v527 = vshrl.u32 %v526, 5
        %v528 = vand.u32 %v526, 31
        %v529 = vsub.s32 32, %v528
        %v530 = vshrl.u32 683565275, %v529
        %v531 = vshll.u32 683565275, %v528
        %v532 = vshrl.u32 2475754826, %v529
        %v533 = vor.u32 %v531, %v532
        %v534 = vshll.u32 2475754826, %v528
        %v535 = vshrl.u32 2131351028, %v529
        %v536 = vor.u32 %v534, %v535
        %v537 = vshll.u32 2131351028, %v528
        %v538 = vshrl.u32 2102212464, %v529
        %v539 = vor.u32 %v537, %v538
        %v540 = vshll.u32 2102212464, %v528
        %v541 = vshrl.u32 920167782, %v529
        %v542 = vor.u32 %v540, %v541
        %v543 = vshll.u32 920167782, %v528
        %v544 = vshrl.u32 1326507024, %v529
        %v545 = vor.u32 %v543, %v544
        %vm546 = vcmp.lt.s32.totalorder %v527, 1
        %vm547 = vcmp.lt.s32.totalorder %v527, 2
        %vm548 = vcmp.lt.s32.totalorder %v527, 3
        %vm549 = vcmp.lt.s32.totalorder %v527, 4
        %v550 = vsel %vm546, %v530, %v533
        %v551 = vsel %vm549, %v539, 2102212464
        %v552 = vsel %vm548, %v536, %v551
        %v553 = vsel %vm547, %v550, %v552
        %v554 = vsel %vm546, %v533, %v536
        %v555 = vsel %vm549, %v542, 920167782
        %v556 = vsel %vm548, %v539, %v555
        %v557 = vsel %vm547, %v554, %v556
        %v558 = vsel %vm546, %v536, %v539
        %v559 = vsel %vm549, %v545, 1326507024
        %v560 = vsel %vm548, %v542, %v559
        %v561 = vsel %vm547, %v558, %v560
        %v562 = vshll.u32 %v522, 8
        %v563 = vmul.u32.u64.compose %v562, %v561
        %v564 = vextract.low.u32 %v563
        %v565 = vextract.high.u32 %v563
        %v566 = vmul.u32.u64.compose %v562, %v557
        %v567 = vextract.low.u32 %v566
        %v568 = vextract.high.u32 %v566
        %v569 = vmul.u32 %v562, %v553
        %v570 = vadd.s32 %v565, %v567
        %vm571 = vc.u32 %v565, %v567
        %v572 = vadd.s32 %v568, 1
        %v573 = vsel %vm571, %v572, %v568
        %v574 = vadd.s32 %v569, %v573
        %v575 = vadd.s32 %v574, 536870912
        %v576 = vshrl.u32 %v575, 30
        %v577 = vshll.u32 %v576, 30
        %v578 = vsub.s32 %v574, %v577
        %vm579 = vcmp.lt.s32.totalorder %v578, 0
        %v580 = vsub.s32 0, %v578
        %v581 = vsel %vm579, %v580, %v578
        %v582 = vclz %v581
        %v583 = vsub.s32 %v582, 2
        %vm584 = vcmp.gt.s32.totalorder 0, %v583
        %v585 = vsel %vm584, 0, %v583
        %v586 = vsub.s32 32, %v585
        %v587 = vshll.u32 %v578, %v585
        %v588 = vshrl.u32 %v570, %v586
        %v589 = vor.u32 %v587, %v588
        %v590 = vsub.s32 4294967266, %v585
        %v591 = vadd.s32 %v590, 127
        %v592 = vshll.u32 %v591, 23
        %v593 = vor.u32 4788187, %v592
        %v594 = vand.u32 2147483647, %v593
        %v596 = vcvt.s32.f32 %v589
        %v597 = vmul.f32 %v596, %v594
        %v598 = vxor.u32 %v597, 2147483648
        %v599 = vsel %vm516, %v598, %v597
        %v600 = vsub.s32 4, %v576
        %v601 = vsel %vm516, %v600, %v576
        %v602 = vsel %vm515, %v306, %v599
        %v603 = vsel %vm515, 0, %v601
        %v604 = vcosq.f32.pop %v602
        %v605 = vsinq.f32.pop %v602
        %vm606 = vweird.f32 %v306
        %v607 = vand.u32 %v603, 3
        %vm608 = vcmp.lt.s32.totalorder %v607, 2
        %vm609 = vcmp.eq.s32.totalorder %v607, 0
        %v610 = vxor.u32 %v605, 2147483648
        %v611 = vsel %vm609, %v604, %v610
        %vm612 = vcmp.eq.s32.totalorder %v607, 2
        %v613 = vxor.u32 %v604, 2147483648
        %v614 = vsel %vm612, %v613, %v605
        %v615 = vsel %vm608, %v611, %v614
        %v616 = vsel %vm606, nan, %v615
        %v617 = vand.u32 2147483647, %v307
        %vm618 = vcmp.le.f32.partialorder %v617, 0.7853982
        %vm619 = vcmp.lt.s32.totalorder %v307, 0
        %v620 = vand.u32 %v307, 2139095040
        %v621 = vshrl.u32 %v620, 23
        %v622 = vsub.s32 %v621, 127
        %v623 = vand.u32 2147483647, %v307
        %v624 = vand.u32 %v623, 8388607
        %v625 = vor.u32 %v624, 8388608
        %v626 = vsub.s32 0, %v625
        %v627 = vadd.s32 %v622, 1
        %vm628 = vcmp.gt.s32.totalorder %v627, 0
        %v629 = vsel %vm628, %v627, 0
        %v630 = vshrl.u32 %v629, 5
        %v631 = vand.u32 %v629, 31
        %v632 = vsub.s32 32, %v631
        %v633 = vshrl.u32 683565275, %v632
        %v634 = vshll.u32 683565275, %v631
        %v635 = vshrl.u32 2475754826, %v632
        %v636 = vor.u32 %v634, %v635
        %v637 = vshll.u32 2475754826, %v631
        %v638 = vshrl.u32 2131351028, %v632
        %v639 = vor.u32 %v637, %v638
        %v640 = vshll.u32 2131351028, %v631
        %v641 = vshrl.u32 2102212464, %v632
        %v642 = vor.u32 %v640, %v641
        %v643 = vshll.u32 2102212464, %v631
        %v644 = vshrl.u32 920167782, %v632
        %v645 = vor.u32 %v643, %v644
        %v646 = vshll.u32 920167782, %v631
        %v647 = vshrl.u32 1326507024, %v632
        %v648 = vor.u32 %v646, %v647
        %vm649 = vcmp.lt.s32.totalorder %v630, 1
        %vm650 = vcmp.lt.s32.totalorder %v630, 2
        %vm651 = vcmp.lt.s32.totalorder %v630, 3
        %vm652 = vcmp.lt.s32.totalorder %v630, 4
        %v653 = vsel %vm649, %v633, %v636
        %v654 = vsel %vm652, %v642, 2102212464
        %v655 = vsel %vm651, %v639, %v654
        %v656 = vsel %vm650, %v653, %v655
        %v657 = vsel %vm649, %v636, %v639
        %v658 = vsel %vm652, %v645, 920167782
        %v659 = vsel %vm651, %v642, %v658
        %v660 = vsel %vm650, %v657, %v659
        %v661 = vsel %vm649, %v639, %v642
        %v662 = vsel %vm652, %v648, 1326507024
        %v663 = vsel %vm651, %v645, %v662
        %v664 = vsel %vm650, %v661, %v663
        %v665 = vshll.u32 %v625, 8
        %v666 = vmul.u32.u64.compose %v665, %v664
        %v667 = vextract.low.u32 %v666
        %v668 = vextract.high.u32 %v666
        %v669 = vmul.u32.u64.compose %v665, %v660
        %v670 = vextract.low.u32 %v669
        %v671 = vextract.high.u32 %v669
        %v672 = vmul.u32 %v665, %v656
        %v673 = vadd.s32 %v668, %v670
        %vm674 = vc.u32 %v668, %v670
        %v675 = vadd.s32 %v671, 1
        %v676 = vsel %vm674, %v675, %v671
        %v677 = vadd.s32 %v672, %v676
        %v678 = vadd.s32 %v677, 536870912
        %v679 = vshrl.u32 %v678, 30
        %v680 = vshll.u32 %v679, 30
        %v681 = vsub.s32 %v677, %v680
        %vm682 = vcmp.lt.s32.totalorder %v681, 0
        %v683 = vsub.s32 0, %v681
        %v684 = vsel %vm682, %v683, %v681
        %v685 = vclz %v684
        %v686 = vsub.s32 %v685, 2
        %vm687 = vcmp.gt.s32.totalorder 0, %v686
        %v688 = vsel %vm687, 0, %v686
        %v689 = vsub.s32 32, %v688
        %v690 = vshll.u32 %v681, %v688
        %v691 = vshrl.u32 %v673, %v689
        %v692 = vor.u32 %v690, %v691
        %v693 = vsub.s32 4294967266, %v688
        %v694 = vadd.s32 %v693, 127
        %v695 = vshll.u32 %v694, 23
        %v696 = vor.u32 4788187, %v695
        %v697 = vand.u32 2147483647, %v696
        %v699 = vcvt.s32.f32 %v692
        %v700 = vmul.f32 %v699, %v697
        %v701 = vxor.u32 %v700, 2147483648
        %v702 = vsel %vm619, %v701, %v700
        %v703 = vsub.s32 4, %v679
        %v704 = vsel %vm619, %v703, %v679
        %v705 = vsel %vm618, %v307, %v702
        %v706 = vsel %vm618, 0, %v704
        %v707 = vcosq.f32.pop %v705
        %v708 = vsinq.f32.pop %v705
        %vm709 = vweird.f32 %v307
        %v710 = vand.u32 %v706, 3
        %vm711 = vcmp.lt.s32.totalorder %v710, 2
        %vm712 = vcmp.eq.s32.totalorder %v710, 0
        %v713 = vxor.u32 %v708, 2147483648
        %v714 = vsel %vm712, %v707, %v713
        %vm715 = vcmp.eq.s32.totalorder %v710, 2
        %v716 = vxor.u32 %v707, 2147483648
        %v717 = vsel %vm715, %v716, %v708
        %v718 = vsel %vm711, %v714, %v717
        %v719 = vsel %vm709, nan, %v718
        %v720 = vand.u32 2147483647, %v304
        %vm721 = vcmp.le.f32.partialorder %v720, 0.7853982
        %vm722 = vcmp.lt.s32.totalorder %v304, 0
        %v723 = vand.u32 %v304, 2139095040
        %v724 = vshrl.u32 %v723, 23
        %v725 = vsub.s32 %v724, 127
        %v726 = vand.u32 2147483647, %v304
        %v727 = vand.u32 %v726, 8388607
        %v728 = vor.u32 %v727, 8388608
        %v729 = vsub.s32 0, %v728
        %v730 = vadd.s32 %v725, 1
        %vm731 = vcmp.gt.s32.totalorder %v730, 0
        %v732 = vsel %vm731, %v730, 0
        %v733 = vshrl.u32 %v732, 5
        %v734 = vand.u32 %v732, 31
        %v735 = vsub.s32 32, %v734
        %v736 = vshrl.u32 683565275, %v735
        %v737 = vshll.u32 683565275, %v734
        %v738 = vshrl.u32 2475754826, %v735
        %v739 = vor.u32 %v737, %v738
        %v740 = vshll.u32 2475754826, %v734
        %v741 = vshrl.u32 2131351028, %v735
        %v742 = vor.u32 %v740, %v741
        %v743 = vshll.u32 2131351028, %v734
        %v744 = vshrl.u32 2102212464, %v735
        %v745 = vor.u32 %v743, %v744
        %v746 = vshll.u32 2102212464, %v734
        %v747 = vshrl.u32 920167782, %v735
        %v748 = vor.u32 %v746, %v747
        %v749 = vshll.u32 920167782, %v734
        %v750 = vshrl.u32 1326507024, %v735
        %v751 = vor.u32 %v749, %v750
        %vm752 = vcmp.lt.s32.totalorder %v733, 1
        %vm753 = vcmp.lt.s32.totalorder %v733, 2
        %vm754 = vcmp.lt.s32.totalorder %v733, 3
        %vm755 = vcmp.lt.s32.totalorder %v733, 4
        %v756 = vsel %vm752, %v736, %v739
        %v757 = vsel %vm755, %v745, 2102212464
        %v758 = vsel %vm754, %v742, %v757
        %v759 = vsel %vm753, %v756, %v758
        %v760 = vsel %vm752, %v739, %v742
        %v761 = vsel %vm755, %v748, 920167782
        %v762 = vsel %vm754, %v745, %v761
        %v763 = vsel %vm753, %v760, %v762
        %v764 = vsel %vm752, %v742, %v745
        %v765 = vsel %vm755, %v751, 1326507024
        %v766 = vsel %vm754, %v748, %v765
        %v767 = vsel %vm753, %v764, %v766
        %v768 = vshll.u32 %v728, 8
        %v769 = vmul.u32.u64.compose %v768, %v767
        %v770 = vextract.low.u32 %v769
        %v771 = vextract.high.u32 %v769
        %v772 = vmul.u32.u64.compose %v768, %v763
        %v773 = vextract.low.u32 %v772
        %v774 = vextract.high.u32 %v772
        %v775 = vmul.u32 %v768, %v759
        %v776 = vadd.s32 %v771, %v773
        %vm777 = vc.u32 %v771, %v773
        %v778 = vadd.s32 %v774, 1
        %v779 = vsel %vm777, %v778, %v774
        %v780 = vadd.s32 %v775, %v779
        %v781 = vadd.s32 %v780, 536870912
        %v782 = vshrl.u32 %v781, 30
        %v783 = vshll.u32 %v782, 30
        %v784 = vsub.s32 %v780, %v783
        %vm785 = vcmp.lt.s32.totalorder %v784, 0
        %v786 = vsub.s32 0, %v784
        %v787 = vsel %vm785, %v786, %v784
        %v788 = vclz %v787
        %v789 = vsub.s32 %v788, 2
        %vm790 = vcmp.gt.s32.totalorder 0, %v789
        %v791 = vsel %vm790, 0, %v789
        %v792 = vsub.s32 32, %v791
        %v793 = vshll.u32 %v784, %v791
        %v794 = vshrl.u32 %v776, %v792
        %v795 = vor.u32 %v793, %v794
        %v796 = vsub.s32 4294967266, %v791
        %v797 = vadd.s32 %v796, 127
        %v798 = vshll.u32 %v797, 23
        %v799 = vor.u32 4788187, %v798
        %v800 = vand.u32 2147483647, %v799
        %v802 = vcvt.s32.f32 %v795
        %v803 = vmul.f32 %v802, %v800
        %v804 = vxor.u32 %v803, 2147483648
        %v805 = vsel %vm722, %v804, %v803
        %v806 = vsub.s32 4, %v782
        %v807 = vsel %vm722, %v806, %v782
        %v808 = vsel %vm721, %v304, %v805
        %v809 = vsel %vm721, 0, %v807
        %v810 = vcosq.f32.pop %v808
        %v811 = vsinq.f32.pop %v808
        %vm812 = vweird.f32 %v304
        %v813 = vadd.s32 %v809, 3
        %v814 = vand.u32 %v813, 3
        %vm815 = vcmp.lt.s32.totalorder %v814, 2
        %vm816 = vcmp.eq.s32.totalorder %v814, 0
        %v817 = vxor.u32 %v811, 2147483648
        %v818 = vsel %vm816, %v810, %v817
        %vm819 = vcmp.eq.s32.totalorder %v814, 2
        %v820 = vxor.u32 %v810, 2147483648
        %v821 = vsel %vm819, %v820, %v811
        %v822 = vsel %vm815, %v818, %v821
        %v823 = vsel %vm812, nan, %v822
        %v824 = vand.u32 2147483647, %v305
        %vm825 = vcmp.le.f32.partialorder %v824, 0.7853982
        %vm826 = vcmp.lt.s32.totalorder %v305, 0
        %v827 = vand.u32 %v305, 2139095040
        %v828 = vshrl.u32 %v827, 23
        %v829 = vsub.s32 %v828, 127
        %v830 = vand.u32 2147483647, %v305
        %v831 = vand.u32 %v830, 8388607
        %v832 = vor.u32 %v831, 8388608
        %v833 = vsub.s32 0, %v832
        %v834 = vadd.s32 %v829, 1
        %vm835 = vcmp.gt.s32.totalorder %v834, 0
        %v836 = vsel %vm835, %v834, 0
        %v837 = vshrl.u32 %v836, 5
        %v838 = vand.u32 %v836, 31
        %v839 = vsub.s32 32, %v838
        %v840 = vshrl.u32 683565275, %v839
        %v841 = vshll.u32 683565275, %v838
        %v842 = vshrl.u32 2475754826, %v839
        %v843 = vor.u32 %v841, %v842
        %v844 = vshll.u32 2475754826, %v838
        %v845 = vshrl.u32 2131351028, %v839
        %v846 = vor.u32 %v844, %v845
        %v847 = vshll.u32 2131351028, %v838
        %v848 = vshrl.u32 2102212464, %v839
        %v849 = vor.u32 %v847, %v848
        %v850 = vshll.u32 2102212464, %v838
        %v851 = vshrl.u32 920167782, %v839
        %v852 = vor.u32 %v850, %v851
        %v853 = vshll.u32 920167782, %v838
        %v854 = vshrl.u32 1326507024, %v839
        %v855 = vor.u32 %v853, %v854
        %vm856 = vcmp.lt.s32.totalorder %v837, 1
        %vm857 = vcmp.lt.s32.totalorder %v837, 2
        %vm858 = vcmp.lt.s32.totalorder %v837, 3
        %vm859 = vcmp.lt.s32.totalorder %v837, 4
        %v860 = vsel %vm856, %v840, %v843
        %v861 = vsel %vm859, %v849, 2102212464
        %v862 = vsel %vm858, %v846, %v861
        %v863 = vsel %vm857, %v860, %v862
        %v864 = vsel %vm856, %v843, %v846
        %v865 = vsel %vm859, %v852, 920167782
        %v866 = vsel %vm858, %v849, %v865
        %v867 = vsel %vm857, %v864, %v866
        %v868 = vsel %vm856, %v846, %v849
        %v869 = vsel %vm859, %v855, 1326507024
        %v870 = vsel %vm858, %v852, %v869
        %v871 = vsel %vm857, %v868, %v870
        %v872 = vshll.u32 %v832, 8
        %v873 = vmul.u32.u64.compose %v872, %v871
        %v874 = vextract.low.u32 %v873
        %v875 = vextract.high.u32 %v873
        %v876 = vmul.u32.u64.compose %v872, %v867
        %v877 = vextract.low.u32 %v876
        %v878 = vextract.high.u32 %v876
        %v879 = vmul.u32 %v872, %v863
        %v880 = vadd.s32 %v875, %v877
        %vm881 = vc.u32 %v875, %v877
        %v882 = vadd.s32 %v878, 1
        %v883 = vsel %vm881, %v882, %v878
        %v884 = vadd.s32 %v879, %v883
        %v885 = vadd.s32 %v884, 536870912
        %v886 = vshrl.u32 %v885, 30
        %v887 = vshll.u32 %v886, 30
        %v888 = vsub.s32 %v884, %v887
        %vm889 = vcmp.lt.s32.totalorder %v888, 0
        %v890 = vsub.s32 0, %v888
        %v891 = vsel %vm889, %v890, %v888
        %v892 = vclz %v891
        %v893 = vsub.s32 %v892, 2
        %vm894 = vcmp.gt.s32.totalorder 0, %v893
        %v895 = vsel %vm894, 0, %v893
        %v896 = vsub.s32 32, %v895
        %v897 = vshll.u32 %v888, %v895
        %v898 = vshrl.u32 %v880, %v896
        %v899 = vor.u32 %v897, %v898
        %v900 = vsub.s32 4294967266, %v895
        %v901 = vadd.s32 %v900, 127
        %v902 = vshll.u32 %v901, 23
        %v903 = vor.u32 4788187, %v902
        %v904 = vand.u32 2147483647, %v903
        %v906 = vcvt.s32.f32 %v899
        %v907 = vmul.f32 %v906, %v904
        %v908 = vxor.u32 %v907, 2147483648
        %v909 = vsel %vm826, %v908, %v907
        %v910 = vsub.s32 4, %v886
        %v911 = vsel %vm826, %v910, %v886
        %v912 = vsel %vm825, %v305, %v909
        %v913 = vsel %vm825, 0, %v911
        %v914 = vcosq.f32.pop %v912
        %v915 = vsinq.f32.pop %v912
        %vm916 = vweird.f32 %v305
        %v917 = vadd.s32 %v913, 3
        %v918 = vand.u32 %v917, 3
        %vm919 = vcmp.lt.s32.totalorder %v918, 2
        %vm920 = vcmp.eq.s32.totalorder %v918, 0
        %v921 = vxor.u32 %v915, 2147483648
        %v922 = vsel %vm920, %v914, %v921
        %vm923 = vcmp.eq.s32.totalorder %v918, 2
        %v924 = vxor.u32 %v914, 2147483648
        %v925 = vsel %vm923, %v924, %v915
        %v926 = vsel %vm919, %v922, %v925
        %v927 = vsel %vm916, nan, %v926
        %v928 = vand.u32 2147483647, %v306
        %vm929 = vcmp.le.f32.partialorder %v928, 0.7853982
        %vm930 = vcmp.lt.s32.totalorder %v306, 0
        %v931 = vand.u32 %v306, 2139095040
        %v932 = vshrl.u32 %v931, 23
        %v933 = vsub.s32 %v932, 127
        %v934 = vand.u32 2147483647, %v306
        %v935 = vand.u32 %v934, 8388607
        %v936 = vor.u32 %v935, 8388608
        %v937 = vsub.s32 0, %v936
        %v938 = vadd.s32 %v933, 1
        %vm939 = vcmp.gt.s32.totalorder %v938, 0
        %v940 = vsel %vm939, %v938, 0
        %v941 = vshrl.u32 %v940, 5
        %v942 = vand.u32 %v940, 31
        %v943 = vsub.s32 32, %v942
        %v944 = vshrl.u32 683565275, %v943
        %v945 = vshll.u32 683565275, %v942
        %v946 = vshrl.u32 2475754826, %v943
        %v947 = vor.u32 %v945, %v946
        %v948 = vshll.u32 2475754826, %v942
        %v949 = vshrl.u32 2131351028, %v943
        %v950 = vor.u32 %v948, %v949
        %v951 = vshll.u32 2131351028, %v942
        %v952 = vshrl.u32 2102212464, %v943
        %v953 = vor.u32 %v951, %v952
        %v954 = vshll.u32 2102212464, %v942
        %v955 = vshrl.u32 920167782, %v943
        %v956 = vor.u32 %v954, %v955
        %v957 = vshll.u32 920167782, %v942
        %v958 = vshrl.u32 1326507024, %v943
        %v959 = vor.u32 %v957, %v958
        %vm960 = vcmp.lt.s32.totalorder %v941, 1
        %vm961 = vcmp.lt.s32.totalorder %v941, 2
        %vm962 = vcmp.lt.s32.totalorder %v941, 3
        %vm963 = vcmp.lt.s32.totalorder %v941, 4
        %v964 = vsel %vm960, %v944, %v947
        %v965 = vsel %vm963, %v953, 2102212464
        %v966 = vsel %vm962, %v950, %v965
        %v967 = vsel %vm961, %v964, %v966
        %v968 = vsel %vm960, %v947, %v950
        %v969 = vsel %vm963, %v956, 920167782
        %v970 = vsel %vm962, %v953, %v969
        %v971 = vsel %vm961, %v968, %v970
        %v972 = vsel %vm960, %v950, %v953
        %v973 = vsel %vm963, %v959, 1326507024
        %v974 = vsel %vm962, %v956, %v973
        %v975 = vsel %vm961, %v972, %v974
        %v976 = vshll.u32 %v936, 8
        %v977 = vmul.u32.u64.compose %v976, %v975
        %v978 = vextract.low.u32 %v977
        %v979 = vextract.high.u32 %v977
        %v980 = vmul.u32.u64.compose %v976, %v971
        %v981 = vextract.low.u32 %v980
        %v982 = vextract.high.u32 %v980
        %v983 = vmul.u32 %v976, %v967
        %v984 = vadd.s32 %v979, %v981
        %vm985 = vc.u32 %v979, %v981
        %v986 = vadd.s32 %v982, 1
        %v987 = vsel %vm985, %v986, %v982
        %v988 = vadd.s32 %v983, %v987
        %v989 = vadd.s32 %v988, 536870912
        %v990 = vshrl.u32 %v989, 30
        %v991 = vshll.u32 %v990, 30
        %v992 = vsub.s32 %v988, %v991
        %vm993 = vcmp.lt.s32.totalorder %v992, 0
        %v994 = vsub.s32 0, %v992
        %v995 = vsel %vm993, %v994, %v992
        %v996 = vclz %v995
        %v997 = vsub.s32 %v996, 2
        %vm998 = vcmp.gt.s32.totalorder 0, %v997
        %v999 = vsel %vm998, 0, %v997
        %v1000 = vsub.s32 32, %v999
        %v1001 = vshll.u32 %v992, %v999
        %v1002 = vshrl.u32 %v984, %v1000
        %v1003 = vor.u32 %v1001, %v1002
        %v1004 = vsub.s32 4294967266, %v999
        %v1005 = vadd.s32 %v1004, 127
        %v1006 = vshll.u32 %v1005, 23
        %v1007 = vor.u32 4788187, %v1006
        %v1008 = vand.u32 2147483647, %v1007
        %v1010 = vcvt.s32.f32 %v1003
        %v1011 = vmul.f32 %v1010, %v1008
        %v1012 = vxor.u32 %v1011, 2147483648
        %v1013 = vsel %vm930, %v1012, %v1011
        %v1014 = vsub.s32 4, %v990
        %v1015 = vsel %vm930, %v1014, %v990
        %v1016 = vsel %vm929, %v306, %v1013
        %v1017 = vsel %vm929, 0, %v1015
        %v1018 = vcosq.f32.pop %v1016
        %v1019 = vsinq.f32.pop %v1016
        %vm1020 = vweird.f32 %v306
        %v1021 = vadd.s32 %v1017, 3
        %v1022 = vand.u32 %v1021, 3
        %vm1023 = vcmp.lt.s32.totalorder %v1022, 2
        %vm1024 = vcmp.eq.s32.totalorder %v1022, 0
        %v1025 = vxor.u32 %v1019, 2147483648
        %v1026 = vsel %vm1024, %v1018, %v1025
        %vm1027 = vcmp.eq.s32.totalorder %v1022, 2
        %v1028 = vxor.u32 %v1018, 2147483648
        %v1029 = vsel %vm1027, %v1028, %v1019
        %v1030 = vsel %vm1023, %v1026, %v1029
        %v1031 = vsel %vm1020, nan, %v1030
        %v1032 = vand.u32 2147483647, %v307
        %vm1033 = vcmp.le.f32.partialorder %v1032, 0.7853982
        %vm1034 = vcmp.lt.s32.totalorder %v307, 0
        %v1035 = vand.u32 %v307, 2139095040
        %v1036 = vshrl.u32 %v1035, 23
        %v1037 = vsub.s32 %v1036, 127
        %v1038 = vand.u32 2147483647, %v307
        %v1039 = vand.u32 %v1038, 8388607
        %v1040 = vor.u32 %v1039, 8388608
        %v1041 = vsub.s32 0, %v1040
        %v1042 = vadd.s32 %v1037, 1
        %vm1043 = vcmp.gt.s32.totalorder %v1042, 0
        %v1044 = vsel %vm1043, %v1042, 0
        %v1045 = vshrl.u32 %v1044, 5
        %v1046 = vand.u32 %v1044, 31
        %v1047 = vsub.s32 32, %v1046
        %v1048 = vshrl.u32 683565275, %v1047
        %v1049 = vshll.u32 683565275, %v1046
        %v1050 = vshrl.u32 2475754826, %v1047
        %v1051 = vor.u32 %v1049, %v1050
        %v1052 = vshll.u32 2475754826, %v1046
        %v1053 = vshrl.u32 2131351028, %v1047
        %v1054 = vor.u32 %v1052, %v1053
        %v1055 = vshll.u32 2131351028, %v1046
        %v1056 = vshrl.u32 2102212464, %v1047
        %v1057 = vor.u32 %v1055, %v1056
        %v1058 = vshll.u32 2102212464, %v1046
        %v1059 = vshrl.u32 920167782, %v1047
        %v1060 = vor.u32 %v1058, %v1059
        %v1061 = vshll.u32 920167782, %v1046
        %v1062 = vshrl.u32 1326507024, %v1047
        %v1063 = vor.u32 %v1061, %v1062
        %vm1064 = vcmp.lt.s32.totalorder %v1045, 1
        %vm1065 = vcmp.lt.s32.totalorder %v1045, 2
        %vm1066 = vcmp.lt.s32.totalorder %v1045, 3
        %vm1067 = vcmp.lt.s32.totalorder %v1045, 4
        %v1068 = vsel %vm1064, %v1048, %v1051
        %v1069 = vsel %vm1067, %v1057, 2102212464
        %v1070 = vsel %vm1066, %v1054, %v1069
        %v1071 = vsel %vm1065, %v1068, %v1070
        %v1072 = vsel %vm1064, %v1051, %v1054
        %v1073 = vsel %vm1067, %v1060, 920167782
        %v1074 = vsel %vm1066, %v1057, %v1073
        %v1075 = vsel %vm1065, %v1072, %v1074
        %v1076 = vsel %vm1064, %v1054, %v1057
        %v1077 = vsel %vm1067, %v1063, 1326507024
        %v1078 = vsel %vm1066, %v1060, %v1077
        %v1079 = vsel %vm1065, %v1076, %v1078
        %v1080 = vshll.u32 %v1040, 8
        %v1081 = vmul.u32.u64.compose %v1080, %v1079
        %v1082 = vextract.low.u32 %v1081
        %v1083 = vextract.high.u32 %v1081
        %v1084 = vmul.u32.u64.compose %v1080, %v1075
        %v1085 = vextract.low.u32 %v1084
        %v1086 = vextract.high.u32 %v1084
        %v1087 = vmul.u32 %v1080, %v1071
        %v1088 = vadd.s32 %v1083, %v1085
        %vm1089 = vc.u32 %v1083, %v1085
        %v1090 = vadd.s32 %v1086, 1
        %v1091 = vsel %vm1089, %v1090, %v1086
        %v1092 = vadd.s32 %v1087, %v1091
        %v1093 = vadd.s32 %v1092, 536870912
        %v1094 = vshrl.u32 %v1093, 30
        %v1095 = vshll.u32 %v1094, 30
        %v1096 = vsub.s32 %v1092, %v1095
        %vm1097 = vcmp.lt.s32.totalorder %v1096, 0
        %v1098 = vsub.s32 0, %v1096
        %v1099 = vsel %vm1097, %v1098, %v1096
        %v1100 = vclz %v1099
        %v1101 = vsub.s32 %v1100, 2
        %vm1102 = vcmp.gt.s32.totalorder 0, %v1101
        %v1103 = vsel %vm1102, 0, %v1101
        %v1104 = vsub.s32 32, %v1103
        %v1105 = vshll.u32 %v1096, %v1103
        %v1106 = vshrl.u32 %v1088, %v1104
        %v1107 = vor.u32 %v1105, %v1106
        %v1108 = vsub.s32 4294967266, %v1103
        %v1109 = vadd.s32 %v1108, 127
        %v1110 = vshll.u32 %v1109, 23
        %v1111 = vor.u32 4788187, %v1110
        %v1112 = vand.u32 2147483647, %v1111
        %v1114 = vcvt.s32.f32 %v1107
        %v1115 = vmul.f32 %v1114, %v1112
        %v1116 = vxor.u32 %v1115, 2147483648
        %v1117 = vsel %vm1034, %v1116, %v1115
        %v1118 = vsub.s32 4, %v1094
        %v1119 = vsel %vm1034, %v1118, %v1094
        %v1120 = vsel %vm1033, %v307, %v1117
        %v1121 = vsel %vm1033, 0, %v1119
        %v1122 = vcosq.f32.pop %v1120
        %v1123 = vsinq.f32.pop %v1120
        %vm1124 = vweird.f32 %v307
        %v1125 = vadd.s32 %v1121, 3
        %v1126 = vand.u32 %v1125, 3
        %vm1127 = vcmp.lt.s32.totalorder %v1126, 2
        %vm1128 = vcmp.eq.s32.totalorder %v1126, 0
        %v1129 = vxor.u32 %v1123, 2147483648
        %v1130 = vsel %vm1128, %v1122, %v1129
        %vm1131 = vcmp.eq.s32.totalorder %v1126, 2
        %v1132 = vxor.u32 %v1122, 2147483648
        %v1133 = vsel %vm1131, %v1132, %v1123
        %v1134 = vsel %vm1127, %v1130, %v1133
        %v1135 = vsel %vm1124, nan, %v1134
        %v1136 = vsub.f32 0.0, %v823
        %v1137 = vsub.f32 0.0, %v927
        %v1138 = vsub.f32 0.0, %v1031
        %v1139 = vsub.f32 0.0, %v1135
        %v1140 = vsel %vm280, 1, 0
        %v1141 = vsel %vm281, 1, 0
        %v1142 = vsel %vm282, 1, 0
        %v1143 = vsel %vm283, 1, 0
        %vm1144 = vcmp.eq.s32.totalorder %v1140, 1
        %vm1145 = vcmp.eq.s32.totalorder %v1141, 1
        %vm1146 = vcmp.eq.s32.totalorder %v1142, 1
        %vm1147 = vcmp.eq.s32.totalorder %v1143, 1
        %v1148 = vsel %vm1144, %v1136, %v823
        %v1149 = vsel %vm1145, %v1137, %v927
        %v1150 = vsel %vm1146, %v1138, %v1031
        %v1151 = vsel %vm1147, %v1139, %v1135
        %v1152 = vld [vmem:[%s218] sm:$0xff]
        %v1153 = vld [vmem:[%s218 + $0x8] sm:$0xff]
        %v1154 = vld [vmem:[%s218 + $0x10] sm:$0xff]
        %v1155 = vld [vmem:[%s218 + $0x18] sm:$0xff]
        %1156 = vrot.lane.b32.xlu0 %v1152, 127
        %v1157 = vpop.permute.xlu0 %1156
        %1158 = vrot.lane.b32.xlu0 %v1153, 127
        %v1159 = vpop.permute.xlu0 %1158
        %1160 = vrot.lane.b32.xlu0 %v1154, 127
        %v1161 = vpop.permute.xlu0 %1160
        %1162 = vrot.lane.b32.xlu0 %v1155, 127
        %v1163 = vpop.permute.xlu0 %1162
        %vm1164 = vcmp.lt.s32.totalorder %v268, 127
        %v1165 = vsel %vm1164, %v1161, %v1163
        %v1166 = vsel %vm1164, %v1159, %v1161
        %v1167 = vsel %vm1164, %v1157, %v1159
        %v1168 = vsel %vm1164, %v1163, %v1157
        %1169 = vrot.lane.b32.xlu0 %v1152, 1
        %v1170 = vpop.permute.xlu0 %1169
        %1171 = vrot.lane.b32.xlu0 %v1153, 1
        %v1172 = vpop.permute.xlu0 %1171
        %1173 = vrot.lane.b32.xlu0 %v1154, 1
        %v1174 = vpop.permute.xlu0 %1173
        %1175 = vrot.lane.b32.xlu0 %v1155, 1
        %v1176 = vpop.permute.xlu0 %1175
        %vm1177 = vcmp.lt.s32.totalorder %v268, 1
        %v1178 = vsel %vm1177, %v1174, %v1176
        %v1179 = vsel %vm1177, %v1172, %v1174
        %v1180 = vsel %vm1177, %v1170, %v1172
        %v1181 = vsel %vm1177, %v1176, %v1170
        %v1182 = vsel %vm1144, %v1167, %v1181
        %v1183 = vsel %vm1145, %v1166, %v1180
        %v1184 = vsel %vm1146, %v1165, %v1179
        %v1185 = vsel %vm1147, %v1168, %v1178
        %v1186 = vmul.f32 %v1152, %v410
        %v1187 = vmul.f32 %v1153, %v513
        %v1188 = vmul.f32 %v1154, %v616
        %v1189 = vmul.f32 %v1155, %v719
        %v1190 = vmul.f32 %v1182, %v1148
        %v1191 = vmul.f32 %v1183, %v1149
        %v1192 = vmul.f32 %v1184, %v1150
        %v1193 = vmul.f32 %v1185, %v1151
        %v1194 = vadd.f32 %v1186, %v1190
        %v1195 = vadd.f32 %v1187, %v1191
        %v1196 = vadd.f32 %v1188, %v1192
        %v1197 = vadd.f32 %v1189, %v1193
        %1198 = vst [vmem:[%s252] sm:$0xff] %v1194
        %1199 = vst [vmem:[%s252 + $0x8] sm:$0xff] %v1195
        %1200 = vst [vmem:[%s252 + $0x10] sm:$0xff] %v1196
        %1201 = vst [vmem:[%s252 + $0x18] sm:$0xff] %v1197
        %v1202 = vld [vmem:[%s227] sm:$0xff]
        %v1203 = vld [vmem:[%s227 + $0x8] sm:$0xff]
        %v1204 = vld [vmem:[%s227 + $0x10] sm:$0xff]
        %v1205 = vld [vmem:[%s227 + $0x18] sm:$0xff]
        %1206 = vrot.lane.b32.xlu0 %v1202, 127
        %v1207 = vpop.permute.xlu0 %1206
        %1208 = vrot.lane.b32.xlu0 %v1203, 127
        %v1209 = vpop.permute.xlu0 %1208
        %1210 = vrot.lane.b32.xlu0 %v1204, 127
        %v1211 = vpop.permute.xlu0 %1210
        %1212 = vrot.lane.b32.xlu0 %v1205, 127
        %v1213 = vpop.permute.xlu0 %1212
        %v1214 = vsel %vm1164, %v1211, %v1213
        %v1215 = vsel %vm1164, %v1209, %v1211
        %v1216 = vsel %vm1164, %v1207, %v1209
        %v1217 = vsel %vm1164, %v1213, %v1207
        %1218 = vrot.lane.b32.xlu0 %v1202, 1
        %v1219 = vpop.permute.xlu0 %1218
        %1220 = vrot.lane.b32.xlu0 %v1203, 1
        %v1221 = vpop.permute.xlu0 %1220
        %1222 = vrot.lane.b32.xlu0 %v1204, 1
        %v1223 = vpop.permute.xlu0 %1222
        %1224 = vrot.lane.b32.xlu0 %v1205, 1
        %v1225 = vpop.permute.xlu0 %1224
        %v1226 = vsel %vm1177, %v1223, %v1225
        %v1227 = vsel %vm1177, %v1221, %v1223
        %v1228 = vsel %vm1177, %v1219, %v1221
        %v1229 = vsel %vm1177, %v1225, %v1219
        %v1230 = vsel %vm1144, %v1216, %v1229
        %v1231 = vsel %vm1145, %v1215, %v1228
        %v1232 = vsel %vm1146, %v1214, %v1227
        %v1233 = vsel %vm1147, %v1217, %v1226
        %v1234 = vmul.f32 %v1202, %v410
        %v1235 = vmul.f32 %v1203, %v513
        %v1236 = vmul.f32 %v1204, %v616
        %v1237 = vmul.f32 %v1205, %v719
        %v1238 = vmul.f32 %v1230, %v1148
        %v1239 = vmul.f32 %v1231, %v1149
        %v1240 = vmul.f32 %v1232, %v1150
        %v1241 = vmul.f32 %v1233, %v1151
        %v1242 = vadd.f32 %v1234, %v1238
        %v1243 = vadd.f32 %v1235, %v1239
        %v1244 = vadd.f32 %v1236, %v1240
        %v1245 = vadd.f32 %v1237, %v1241
        %1246 = vst [vmem:[%s259] sm:$0xff] %v1242
        %1247 = vst [vmem:[%s259 + $0x8] sm:$0xff] %v1243
        %1248 = vst [vmem:[%s259 + $0x10] sm:$0xff] %v1244
        %1249 = vst [vmem:[%s259 + $0x18] sm:$0xff] %v1245
        %s1250 = sand.u32 %s105, 1
        %s1251 = scalar_lea.sflag [#allocation4], %s1250
        %s1252 = sand.u32 %s105, 1
        %s1253 = smul.addr %s1252, 32
        %s1254 = scalar_lea.vmem [#allocation7], %s1253
        %s1255 = sand.u32 %s133, 1
        %s1256 = scalar_lea.sflag [#allocation9], %s1255
        %s1257 = sand.u32 %s133, 1
        %s1258 = smul.addr %s1257, 32
        %s1259 = scalar_lea.vmem [#allocation8], %s1258
        // Predicated region
        $region37: #{tpu_custom_call.1} parent=27 // pred_check
          %p1260 = pneg %p115
        $region38: #{tpu_custom_call.1} parent=27 // pred_check_branch
          %1262 = sbr.rel (%p1260) target = $region40
        $region39: #{tpu_custom_call.1} parent=27 // pred_region
          %s1264 = ssub.s32 512, 512
          %1265 = vsyncadd %s1251, %s1264
          %s1266 = smul.addr %s32, 4
          %s1267 = smul.addr %s31, 4
          %s1268 = sadd.s32 %s1266, %s1267
          %s1269 = smul.addr %s1268, 128
          %s1270 = scalar_lea.hbm %s2, %s1269
          %s1272 = sshll.u32 %s1254, 4
          %s1273 = int_to_ptr.vmem [resolvable:$true] %s1272
          %1275 = dma.vmem_to_hbm [thread:$0]  %s1273, 512, %s1270, %s1251
        $region40: #{tpu_custom_call.1} parent=27 // pred_fallthru
          _
        // Predicated region
        $region41: #{tpu_custom_call.1} parent=27 // pred_check
          %p1276 = pneg %p143
        $region42: #{tpu_custom_call.1} parent=27 // pred_check_branch
          %1278 = sbr.rel (%p1276) target = $region44
        $region43: #{tpu_custom_call.1} parent=27 // pred_region
          %s1280 = ssub.s32 512, 512
          %1281 = vsyncadd %s1256, %s1280
          %s1282 = smul.addr %s32, 4
          %s1283 = smul.addr %s31, 4
          %s1284 = sadd.s32 %s1282, %s1283
          %s1285 = smul.addr %s1284, 128
          %s1286 = scalar_lea.hbm %s3, %s1285
          %s1288 = sshll.u32 %s1259, 4
          %s1289 = int_to_ptr.vmem [resolvable:$true] %s1288
          %1291 = dma.vmem_to_hbm [thread:$0]  %s1289, 512, %s1286, %s1256
        $region44: #{tpu_custom_call.1} parent=27 // pred_fallthru
          _
      $region28: #{tpu_custom_call.1} parent=5 // pred_fallthru
        _
      %p1292 = scmp.le.s32.totalorder 2, %s22
      // Predicated region
      $region45: #{tpu_custom_call.1} parent=5 // pred_check
        %p1293 = pneg %p1292
      $region46: #{tpu_custom_call.1} parent=5 // pred_check_branch
        %1295 = sbr.rel (%p1293) target = $region48
      $region47: #{tpu_custom_call.1} parent=5 // pred_region
        %s1296 = ssub.s32 %s22, 2
        // Predicated region
        $region49: #{tpu_custom_call.1} parent=47 // pred_check
          %p1297 = pneg %p121
        $region50: #{tpu_custom_call.1} parent=47 // pred_check_branch
          %1299 = sbr.rel (%p1297) target = $region52
        $region51: #{tpu_custom_call.1} parent=47 // pred_region
          %s1300 = sand.u32 %s106, 1
          %s1301 = scalar_lea.sflag [#allocation4], %s1300
          %s1302 = sand.u32 %s106, 1
          %s1303 = smul.addr %s1302, 32
          %s1304 = scalar_lea.vmem [#allocation7], %s1303
          %1305 = dma.done %s1301, 512
        $region52: #{tpu_custom_call.1} parent=47 // pred_fallthru
          _
        // Predicated region
        $region53: #{tpu_custom_call.1} parent=47 // pred_check
          %p1306 = pneg %p149
        $region54: #{tpu_custom_call.1} parent=47 // pred_check_branch
          %1308 = sbr.rel (%p1306) target = $region56
        $region55: #{tpu_custom_call.1} parent=47 // pred_region
          %s1309 = sand.u32 %s134, 1
          %s1310 = scalar_lea.sflag [#allocation9], %s1309
          %s1311 = sand.u32 %s134, 1
          %s1312 = smul.addr %s1311, 32
          %s1313 = scalar_lea.vmem [#allocation8], %s1312
          %1314 = dma.done %s1310, 512
        $region56: #{tpu_custom_call.1} parent=47 // pred_fallthru
          _
      $region48: #{tpu_custom_call.1} parent=5 // pred_fallthru
        _
    $region6: #{tpu_custom_call.1} parent=1 // loop_footer
      %s26 = sadd.s32 1, %s22
    $region7: #{tpu_custom_call.1} parent=1 // loop_footer_branch
      %21 = sbr.rel target = $region3
    $region8: #{tpu_custom_call.1} parent=1 // loop_exit
      _
    %1315 = vsyncpa [#allocation3], 1
    %s1316 = scalar_lea.sflag [#allocation3], 1
    %1317 = vsyncpa %s1316, 1
    %1318 = vsyncpa [#allocation6], 1
    %s1319 = scalar_lea.sflag [#allocation6], 1
    %1320 = vsyncpa %s1319, 1
    %1321 = vsyncpa [#allocation4], 1
    %s1322 = scalar_lea.sflag [#allocation4], 1
    %1323 = vsyncpa %s1322, 1
    %1324 = vsyncpa [#allocation9], 1
    %s1325 = scalar_lea.sflag [#allocation9], 1
    %1326 = vsyncpa %s1325, 1

</llo_original>
